<compile_context>
chip_gen: v5e
topology: v5e:2x2
jax: 0.10.0
libtpu: 0.0.40
codegen_flags: <defaults>
</compile_context>

<pallas_src>
import functools
import math

import jax
import jax.numpy as jnp
from jax.experimental import pallas as pl
from jax.experimental.pallas import tpu as pltpu


# ----------------------------- tiling helper --------------------------------
def _row_tile(n_rows, d, itemsize, *, max_block_bytes=2 * 1024 * 1024, max_rows=1024):
    """Largest power-of-two divisor of n_rows whose (rows, d) block fits the budget."""
    cap = max(1, min(max_rows, max_block_bytes // max(1, d * itemsize)))
    t = 1
    while t * 2 <= cap and n_rows % (t * 2) == 0:
        t *= 2
    if t % 8 != 0:
        # No 8-row-aligned divisor tile available: use the full row axis so the
        # block equals the array dim (always a legal TPU block shape).
        return n_rows
    return t


_VMEM_LIMIT = 32 * 1024 * 1024  # explicit scoped-VMEM budget (fits v5e/v6e/v7x)


# --------------------------- LayerNormalization ------------------------------
def _layernorm_kernel(alpha_ref, bias_ref, x_ref, o_ref, *, eps):
    # x_ref block: (tile_rows, D).  Stats in f32, output cast back to x dtype.
    x = x_ref[...].astype(jnp.float32)
    d = x.shape[-1]
    mean = jnp.mean(x, axis=-1, keepdims=True)
    centered = x - mean
    # torch.Tensor.std defaults to the unbiased (N-1) estimator.
    var = jnp.sum(centered * centered, axis=-1, keepdims=True) / (d - 1)
    std = jnp.sqrt(var)
    alpha = alpha_ref[0]
    bias = bias_ref[0]
    y = alpha * centered / (std + eps) + bias
    o_ref[...] = y.astype(o_ref.dtype)


def layer_norm(x, alpha, bias, *, eps=1e-6):
    """LayerNormalization.forward: alpha * (x - mean) / (std + eps) + bias."""
    orig_shape = x.shape
    D = orig_shape[-1]
    N = x.size // D
    x2 = x.reshape(N, D)
    tN = _row_tile(N, D, x.dtype.itemsize)
    grid = (N // tN,)

    out = pl.pallas_call(
        functools.partial(_layernorm_kernel, eps=float(eps)),
        out_shape=jax.ShapeDtypeStruct((N, D), x.dtype),
        grid=grid,
        in_specs=[
            pl.BlockSpec(memory_space=pltpu.MemorySpace.SMEM),  # alpha (1,)
            pl.BlockSpec(memory_space=pltpu.MemorySpace.SMEM),  # bias  (1,)
            pl.BlockSpec((tN, D), lambda i: (i, 0)),
        ],
        out_specs=pl.BlockSpec((tN, D), lambda i: (i, 0)),
        compiler_params=pltpu.CompilerParams(
            dimension_semantics=("parallel",),
            vmem_limit_bytes=_VMEM_LIMIT,
        ),
    )(
        jnp.asarray(alpha, jnp.float32).reshape(1),
        jnp.asarray(bias, jnp.float32).reshape(1),
        x2,
    )
    return out.reshape(orig_shape)


# ------------------------ residual add (+ dropout) ---------------------------
def _residual_add_kernel(x_ref, sub_ref, o_ref):
    o_ref[...] = x_ref[...] + sub_ref[...]


def _residual_add_dropout_kernel(x_ref, sub_ref, bits_ref, o_ref, *, threshold, scale):
    x = x_ref[...]
    sub = sub_ref[...]
    keep = bits_ref[...] >= jnp.uint32(threshold)          # P(drop) = threshold / 2^32
    scale_c = jnp.asarray(scale, dtype=sub.dtype)          # keep math in activation dtype
    kept = jnp.where(keep, sub * scale_c, jnp.zeros_like(sub))
    o_ref[...] = x + kept


def residual_add_dropout(x, sub_out, *, dropout_p=0.0, train=False, rng_key=None):
    """x + dropout(sub_out), dropout active only in train mode."""
    assert x.shape == sub_out.shape and x.dtype == sub_out.dtype
    orig_shape = x.shape
    D = orig_shape[-1]
    N = x.size // D
    x2 = x.reshape(N, D)
    s2 = sub_out.reshape(N, D)
    tN = _row_tile(N, D, x.dtype.itemsize)
    grid = (N // tN,)
    block = pl.BlockSpec((tN, D), lambda i: (i, 0))
    cparams = pltpu.CompilerParams(
        dimension_semantics=("parallel",),
        vmem_limit_bytes=_VMEM_LIMIT,
    )
    # TODO(synk): when the caller donates x, input_output_aliases={0: 0} would
    # reuse its HBM buffer for the output (pure footprint win, no BW change).

    use_dropout = train and dropout_p > 0.0
    if use_dropout and dropout_p >= 1.0:
        return x  # everything dropped -> residual only

    if not use_dropout:
        out = pl.pallas_call(
            _residual_add_kernel,
            out_shape=jax.ShapeDtypeStruct((N, D), x.dtype),
            grid=grid,
            in_specs=[block, block],
            out_specs=block,
            compiler_params=cparams,
        )(x2, s2)
    else:
        if rng_key is None:
            raise ValueError("rng_key is required for train-mode dropout")
        # Random bits from jax.random (portable: no TPU-only PRNG primitive).
        # Note: RNG stream differs from torch.nn.Dropout (distribution-equal only).
        bits = jax.random.bits(rng_key, (N, D), dtype=jnp.uint32)
        threshold = min(int(dropout_p * (2.0 ** 32)), 2 ** 32 - 1)
        scale = 1.0 / (1.0 - dropout_p)
        out = pl.pallas_call(
            functools.partial(
                _residual_add_dropout_kernel, threshold=threshold, scale=scale
            ),
            out_shape=jax.ShapeDtypeStruct((N, D), x.dtype),
            grid=grid,
            in_specs=[block, block, block],
            out_specs=block,
            compiler_params=cparams,
        )(x2, s2, bits)
    return out.reshape(orig_shape)


# --------------------------- ResidualConnection ------------------------------
def residual_connection(
    x, sublayer, *, alpha, bias, eps=1e-6, dropout_p=0.0, train=False, rng_key=None
):
    """ResidualConnection.forward: x + dropout(sublayer(norm(x)))."""
    normed = layer_norm(x, alpha, bias, eps=eps)
    sub_out = sublayer(normed)                      # arbitrary callable, plain JAX
    return residual_add_dropout(
        x, sub_out, dropout_p=dropout_p, train=train, rng_key=rng_key
    )


# --------------------------------- demo --------------------------------------
def _layer_norm_ref(x, alpha, bias, eps):
    mean = jnp.mean(x, axis=-1, keepdims=True)
    d = x.shape[-1]
    std = jnp.sqrt(jnp.sum((x - mean) ** 2, axis=-1, keepdims=True) / (d - 1))
    return alpha * (x - mean) / (std + eps) + bias


if __name__ == "__main__":
    batch, seq, d_model = 2, 8, 128   # lane-dense feature dim (multiple of 128)
    dropout_p = 0.1
    eps = 1e-6

    key = jax.random.PRNGKey(0)
    kx, kw, kd = jax.random.split(key, 3)
    x = jax.random.normal(kx, (batch, seq, d_model), dtype=jnp.float32)

    # Deterministic stand-in "sublayer" (e.g. a projection), applied in plain JAX.
    w = jax.random.normal(kw, (d_model, d_model), dtype=jnp.float32) * 0.02
    sublayer = lambda h: jnp.dot(h, w)

    # nn.Parameter(torch.ones(1)) for both alpha and bias, per the module.
    alpha = jnp.ones((1,), jnp.float32)
    bias = jnp.ones((1,), jnp.float32)

    # Eval mode (dropout is identity) -> exact check against a plain-JAX reference.
    out = residual_connection(
        x, sublayer, alpha=alpha, bias=bias, eps=eps,
        dropout_p=dropout_p, train=False,
    )
    out = jax.block_until_ready(out)

    ref = x + sublayer(_layer_norm_ref(x, alpha[0], bias[0], eps))
    assert jnp.allclose(out, ref, atol=1e-4, rtol=1e-4), "mismatch vs reference"

    # Train mode exercises the in-kernel dropout (mask applied inside the kernel).
    out_train = residual_connection(
        x, sublayer, alpha=alpha, bias=bias, eps=eps,
        dropout_p=dropout_p, train=True, rng_key=kd,
    )
    jax.block_until_ready(out_train)

    print("KERNEL_OK")
</pallas_src>

<mosaic_0001>
module attributes {stable_mosaic.version = 11 : i64} {
  func.func @_layernorm_kernel(%arg0: i32, %arg1: memref<1xf32, #tpu.memory_space<smem>>, %arg2: memref<1xf32, #tpu.memory_space<smem>>, %arg3: memref<16x128xf32, #tpu.memory_space<vmem>>, %arg4: memref<16x128xf32, #tpu.memory_space<vmem>>) attributes {dimension_semantics = [#tpu.dimension_semantics<parallel>], iteration_bounds = array<i64: 1>, scalar_prefetch = 0 : i64, scratch_operands = 0 : i64, tpu.core_type = #tpu.core_type<tc>, window_params = [{transform_indices = @transform_0, window_bounds = array<i64: 1>}, {transform_indices = @transform_1, window_bounds = array<i64: 1>}, {transform_indices = @transform_2, window_bounds = array<i64: 16, 128>}, {transform_indices = @transform_3, window_bounds = array<i64: 16, 128>}]} {
    %c0 = arith.constant 0 : index
    %c0_0 = arith.constant 0 : index
    %0 = vector.load %arg3[%c0, %c0_0] : memref<16x128xf32, #tpu.memory_space<vmem>>, vector<16x128xf32>
    %cst = arith.constant dense<0.000000e+00> : vector<16xf32>
    %1 = vector.multi_reduction <add>, %0, %cst [1] : vector<16x128xf32> to vector<16xf32>
    %2 = vector.shape_cast %1 : vector<16xf32> to vector<16x1xf32>
    %cst_1 = arith.constant 1.280000e+02 : f32
    %3 = vector.broadcast %cst_1 : f32 to vector<16x1xf32>
    %4 = arith.divf %2, %3 : vector<16x1xf32>
    %5 = vector.broadcast %4 : vector<16x1xf32> to vector<16x128xf32>
    %6 = arith.subf %0, %5 : vector<16x128xf32>
    %7 = arith.mulf %6, %6 : vector<16x128xf32>
    %cst_2 = arith.constant dense<0.000000e+00> : vector<16xf32>
    %8 = vector.multi_reduction <add>, %7, %cst_2 [1] : vector<16x128xf32> to vector<16xf32>
    %9 = vector.shape_cast %8 : vector<16xf32> to vector<16x1xf32>
    %cst_3 = arith.constant 1.270000e+02 : f32
    %10 = vector.broadcast %cst_3 : f32 to vector<16x1xf32>
    %11 = arith.divf %9, %10 : vector<16x1xf32>
    %12 = math.sqrt %11 : vector<16x1xf32>
    %c0_4 = arith.constant 0 : index
    %13 = memref.load %arg1[%c0_4] : memref<1xf32, #tpu.memory_space<smem>>
    %c0_5 = arith.constant 0 : index
    %14 = memref.load %arg2[%c0_5] : memref<1xf32, #tpu.memory_space<smem>>
    %15 = vector.broadcast %13 : f32 to vector<16x128xf32>
    %16 = arith.mulf %15, %6 : vector<16x128xf32>
    %cst_6 = arith.constant 9.99999997E-7 : f32
    %17 = vector.broadcast %cst_6 : f32 to vector<16x1xf32>
    %18 = arith.addf %12, %17 : vector<16x1xf32>
    %19 = vector.broadcast %18 : vector<16x1xf32> to vector<16x128xf32>
    %20 = arith.divf %16, %19 : vector<16x128xf32>
    %21 = vector.broadcast %14 : f32 to vector<16x128xf32>
    %22 = arith.addf %20, %21 : vector<16x128xf32>
    %c0_7 = arith.constant 0 : index
    %c0_8 = arith.constant 0 : index
    %23 = vector.load %arg4[%c0_7, %c0_8] : memref<16x128xf32, #tpu.memory_space<vmem>>, vector<16x128xf32>
    tpu.vector_store %arg4[%c0_7, %c0_8], %22 {strides = array<i32>} : memref<16x128xf32, #tpu.memory_space<vmem>>, vector<16x128xf32>,
    return
  }
  func.func @transform_0(%arg0: i32) -> i32 {
    %c0_i32 = arith.constant 0 : i32
    %c0_i32_0 = arith.constant 0 : i32
    return %c0_i32 : i32
  }
  func.func @transform_1(%arg0: i32) -> i32 {
    %c0_i32 = arith.constant 0 : i32
    %c0_i32_0 = arith.constant 0 : i32
    return %c0_i32 : i32
  }
  func.func @transform_2(%arg0: i32) -> (i32, i32) {
    %c0_i32 = arith.constant 0 : i32
    %c0_i32_0 = arith.constant 0 : i32
    return %arg0, %c0_i32 : i32, i32
  }
  func.func @transform_3(%arg0: i32) -> (i32, i32) {
    %c0_i32 = arith.constant 0 : i32
    %c0_i32_0 = arith.constant 0 : i32
    return %arg0, %c0_i32 : i32, i32
  }
}

</mosaic_0001>

<llo_original>
// kernel: tpu_custom_call.1
$region0: #{tpu_custom_call.1}
  #allocation0 [shape = 'u32[]', space=smem, size = 0x4, offset = 0x4, fixed_abs, tag = 'smem constant byte address 0x4 - core index']
  #allocation1 [shape = 'u32[72,128]{1,0:T(1,128)}', space=vmem, size = 0x9000, scoped, tag = 'internal scratch']
  #allocation2 [shape = 'f32[1]{0:T(128)S(6)}', space=smem, size = 0x200, scoped, tag = 'scoped memory for tpu_custom_call.1']
  #allocation3 [shape = 'f32[1]{0:T(128)S(6)}', space=smem, size = 0x200, scoped, tag = 'scoped memory for tpu_custom_call.1']
  %s0 = inlined_call_operand.<no memory space> [shape: f32[1], index: 0, kind: input, shape index: {}]
  %s1 = inlined_call_operand.<no memory space> [shape: f32[1], index: 1, kind: input, shape index: {}]
  %s2 = inlined_call_operand.hbm [shape: f32[16,128], index: 2, kind: input, shape index: {}]
  %s3 = inlined_call_operand.hbm [shape: f32[16,128], index: 3, kind: output, shape index: {}]
  %s4 = sld [smem:[#allocation0]]
  $region26: #{tpu_custom_call.1} parent=0
    _
  %s6 = ssub.s32 1, %s4
  %s7 = scalar_select 0, %s6, %s4
  %8 = sst [smem:[#allocation2]] %s0
  %9 = sst [smem:[#allocation3]] %s1
  $region1: #{tpu_custom_call.1} parent=0
    #allocation4 [shape = 'u8[8192]{0}', space=vmem, size = 0x2000, scoped, tag = 'input window, operand 2, single buffered']
    #allocation5 [shape = 's32[1]{0}', space=sflag, size = 0x4, scoped, tag = 'scoped memory for tpu_custom_call.1']
    #allocation6 [shape = 's32[1]{0}', space=sflag, size = 0x4, scoped, tag = 'scoped memory for tpu_custom_call.1']
    #allocation7 [shape = 'u8[8192]{0}', space=vmem, size = 0x2000, scoped, tag = 'output window, operand 0, single buffered']
    %10 = vsyncpa [#allocation5], 0
    %11 = vsyncpa [#allocation6], 0
    // Predicated region
    $region2: #{tpu_custom_call.1} parent=1 // pred_check
      _
    $region3: #{tpu_custom_call.1} parent=1 // pred_check_branch
      %13 = sbr.rel (0) target = $region5
    $region4: #{tpu_custom_call.1} parent=1 // pred_region
      _
    $region5: #{tpu_custom_call.1} parent=1 // pred_fallthru
      _
    // Predicated region
    $region6: #{tpu_custom_call.1} parent=1 // pred_check
      _
    $region7: #{tpu_custom_call.1} parent=1 // pred_check_branch
      %15 = sbr.rel (0) target = $region9
    $region8: #{tpu_custom_call.1} parent=1 // pred_region
      _
    $region9: #{tpu_custom_call.1} parent=1 // pred_fallthru
      _
    // Predicated region
    $region10: #{tpu_custom_call.1} parent=1 // pred_check
      _
    $region11: #{tpu_custom_call.1} parent=1 // pred_check_branch
      %17 = sbr.rel (0) target = $region13
    $region12: #{tpu_custom_call.1} parent=1 // pred_region
      %19 = vsyncadd [#allocation5], 0
      %s20 = sshll.u32 %s2, 4
      %s21 = int_to_ptr.hbm [resolvable:$true] %s20
      %s22 = sshll.u32 [#allocation4], 4
      %s23 = int_to_ptr.vmem [resolvable:$true] %s22
      %28 = dma.hbm_to_vmem [thread:$0]  %s21, 256, %s23, [#allocation5], 128, 128, 8
    $region13: #{tpu_custom_call.1} parent=1 // pred_fallthru
      _
    // Predicated region
    $region14: #{tpu_custom_call.1} parent=1 // pred_check
      _
    $region15: #{tpu_custom_call.1} parent=1 // pred_check_branch
      %30 = sbr.rel (0) target = $region17
    $region16: #{tpu_custom_call.1} parent=1 // pred_region
      %32 = dma.done [#allocation5], 256
    $region17: #{tpu_custom_call.1} parent=1 // pred_fallthru
      _
    %v33 = vld [vmem:[#allocation4] sm:$0xff]
    %v34 = vld [vmem:[#allocation4 + $0x8] sm:$0xff]
    %35 = vadd.xlane.f32.xlu0 %v33
    %v36 = vpop.xlane.xlu0 %35
    %37 = vadd.xlane.f32.xlu0 %v34
    %v38 = vpop.xlane.xlu0 %37
    %v39 = vrcp.pop 128.0
    %v40 = vmul.f32 128.0, %v39
    %v41 = vsub.f32 1.0, %v40
    %v42 = vmul.f32 %v39, %v41
    %v43 = vadd.f32 %v39, %v42
    %vm44 = vweird.f32 %v39
    %v45 = vsel %vm44, %v39, %v43
    %v46 = vmul.f32 %v36, %v45
    %v47 = vmul.f32 %v38, %v45
    %v48 = vsub.f32 %v33, %v46
    %v49 = vsub.f32 %v34, %v47
    %v50 = vmul.f32 %v48, %v48
    %v51 = vmul.f32 %v49, %v49
    %52 = vadd.xlane.f32.xlu0 %v50
    %v53 = vpop.xlane.xlu0 %52
    %54 = vadd.xlane.f32.xlu0 %v51
    %v55 = vpop.xlane.xlu0 %54
    %v56 = vrcp.pop 127.0
    %v57 = vmul.f32 127.0, %v56
    %v58 = vsub.f32 1.0, %v57
    %v59 = vmul.f32 %v56, %v58
    %v60 = vadd.f32 %v56, %v59
    %vm61 = vweird.f32 %v56
    %v62 = vsel %vm61, %v56, %v60
    %v63 = vmul.f32 %v53, %v62
    %v64 = vmul.f32 %v55, %v62
    %v65 = vrsqrt.pop %v63
    %v66 = vmul.f32 %v65, %v63
    %v67 = vmul.f32 %v66, %v65
    %v68 = vmul.f32 0.5, %v67
    %v69 = vsub.f32 1.5, %v68
    %v70 = vmul.f32 %v65, %v69
    %v71 = vmul.f32 %v63, %v70
    %vm72 = vcmp.eq.f32.partialorder %v63, inf
    %v73 = vsel %vm72, %v63, %v71
    %vm74 = vcmp.eq.f32.partialorder %v63, 0.0
    %v75 = vand.u32 %v63, 2147483648
    %v76 = vsel %vm74, %v75, %v73
    %v77 = vrsqrt.pop %v64
    %v78 = vmul.f32 %v77, %v64
    %v79 = vmul.f32 %v78, %v77
    %v80 = vmul.f32 0.5, %v79
    %v81 = vsub.f32 1.5, %v80
    %v82 = vmul.f32 %v77, %v81
    %v83 = vmul.f32 %v64, %v82
    %vm84 = vcmp.eq.f32.partialorder %v64, inf
    %v85 = vsel %vm84, %v64, %v83
    %vm86 = vcmp.eq.f32.partialorder %v64, 0.0
    %v87 = vand.u32 %v64, 2147483648
    %v88 = vsel %vm86, %v87, %v85
    %s89 = sld [smem:[#allocation2]]
    %s90 = sld [smem:[#allocation3]]
    %v91 = vstv %s89
    %v92 = vmul.f32 %v91, %v48
    %v93 = vmul.f32 %v91, %v49
    %v94 = vadd.f32 %v76, 1e-06
    %v95 = vadd.f32 %v88, 1e-06
    %v96 = vrcp.pop %v94
    %v97 = vmul.f32 %v94, %v96
    %v98 = vsub.f32 1.0, %v97
    %v99 = vmul.f32 %v96, %v98
    %v100 = vadd.f32 %v96, %v99
    %vm101 = vweird.f32 %v94
    %vm102 = vweird.f32 %v96
    %vm103 = vmor %vm101, %vm102
    %v104 = vsel %vm103, %v96, %v100
    %v105 = vand.u32 2147483647, %v94
    %vm106 = vcmp.eq.f32.partialorder %v105, 8.507059e+37
    %v107 = vand.u32 %v94, 2147483648
    %v108 = vor.u32 1.1754944e-38, %v107
    %v109 = vsel %vm106, %v108, %v104
    %v110 = vmul.f32 %v92, %v109
    %v111 = vrcp.pop %v95
    %v112 = vmul.f32 %v95, %v111
    %v113 = vsub.f32 1.0, %v112
    %v114 = vmul.f32 %v111, %v113
    %v115 = vadd.f32 %v111, %v114
    %vm116 = vweird.f32 %v95
    %vm117 = vweird.f32 %v111
    %vm118 = vmor %vm116, %vm117
    %v119 = vsel %vm118, %v111, %v115
    %v120 = vand.u32 2147483647, %v95
    %vm121 = vcmp.eq.f32.partialorder %v120, 8.507059e+37
    %v122 = vand.u32 %v95, 2147483648
    %v123 = vor.u32 1.1754944e-38, %v122
    %v124 = vsel %vm121, %v123, %v119
    %v125 = vmul.f32 %v93, %v124
    %v126 = vstv %s90
    %v127 = vadd.f32 %v110, %v126
    %v128 = vadd.f32 %v125, %v126
    %129 = vst [vmem:[#allocation7] sm:$0xff] %v127
    %130 = vst [vmem:[#allocation7 + $0x8] sm:$0xff] %v128
    // Predicated region
    $region18: #{tpu_custom_call.1} parent=1 // pred_check
      _
    $region19: #{tpu_custom_call.1} parent=1 // pred_check_branch
      %132 = sbr.rel (0) target = $region21
    $region20: #{tpu_custom_call.1} parent=1 // pred_region
      %134 = vsyncadd [#allocation6], 0
      %s135 = sshll.u32 [#allocation7], 4
      %s136 = int_to_ptr.vmem [resolvable:$true] %s135
      %s137 = sshll.u32 %s3, 4
      %s138 = int_to_ptr.hbm [resolvable:$true] %s137
      %143 = dma.vmem_to_hbm [thread:$0]  %s136, 256, %s138, [#allocation6], 128, 128, 8
    $region21: #{tpu_custom_call.1} parent=1 // pred_fallthru
      _
    // Predicated region
    $region22: #{tpu_custom_call.1} parent=1 // pred_check
      _
    $region23: #{tpu_custom_call.1} parent=1 // pred_check_branch
      %145 = sbr.rel (0) target = $region25
    $region24: #{tpu_custom_call.1} parent=1 // pred_region
      %147 = dma.done [#allocation6], 256
    $region25: #{tpu_custom_call.1} parent=1 // pred_fallthru
      _
    %148 = vsyncpa [#allocation5], 1
    %149 = vsyncpa [#allocation6], 1

</llo_original>
